<compile_context>
chip_gen: v6e
topology: v6e:2x2x1
jax: 0.10.0
libtpu: 0.0.40
codegen_flags: <defaults>
</compile_context>

<pallas_src>
import functools

import jax
import jax.numpy as jnp
from jax.experimental import pallas as pl
from jax.experimental.pallas import tpu as pltpu

_MIB = 1024 * 1024


def _ce_kernel(x_ref, t_ref, o_ref, m_acc, s_acc, lin_acc, *,
               epsilon: float, num_classes: int, class_tile: int):
    """One (TM, TC) logits chunk of label-smoothed NLL, online over class chunks.

    per_sample = (eps-1)*x[t] - (eps/C)*sum(x) + max(x) + log(sum(exp(x-max)))
    which equals (eps-1)*logp[t] - eps*mean(logp) with logp = log_softmax(x),
    without ever materializing the [TM, C] log-prob tensor.
    """
    k = pl.program_id(1)
    num_k = pl.num_programs(1)

    @pl.when(k == 0)
    def _init():
        m_acc[...] = jnp.full_like(m_acc, -jnp.inf)
        s_acc[...] = jnp.zeros_like(s_acc)
        lin_acc[...] = jnp.zeros_like(lin_acc)

    x = x_ref[...]                                 # [TM, TC] native dtype
    t = t_ref[...]                                 # [TM, 1]  int32

    class_ids = class_tile * k + jax.lax.broadcasted_iota(jnp.int32, x.shape, 1)
    needs_col_mask = (num_classes % class_tile) != 0   # padded tail class chunk

    if needs_col_mask:
        col_ok = class_ids < num_classes
        x_max_src = jnp.where(col_ok, x, -jnp.inf)     # stays native dtype
    else:
        x_max_src = x

    # Pass 1: chunk max in the native dtype (exact), promoted to f32.
    m_prev = m_acc[...]
    m_new = jnp.maximum(
        m_prev, jnp.max(x_max_src, axis=-1, keepdims=True).astype(jnp.float32))

    # Pass 2: one traversal -> sum(exp(x - m)) plus the fused linear term
    # (eps-1)*x[t] - (eps/C)*sum(x).  The f32 upcast happens per use; the
    # whole-tile f32 copy is never stored.
    p = jnp.exp(x_max_src - m_new)                 # native - f32 -> f32; masked cols -> 0
    s_acc[...] = (s_acc[...] * jnp.exp(m_prev - m_new)
                  + jnp.sum(p, axis=-1, keepdims=True))
    m_acc[...] = m_new

    xl = x.astype(jnp.float32)
    if needs_col_mask:
        xl = jnp.where(class_ids < num_classes, xl, 0.0)
    lin_acc[...] += jnp.sum(
        jnp.where(class_ids == t, (epsilon - 1.0) * xl, 0.0)
        - (epsilon / num_classes) * xl,
        axis=-1, keepdims=True)

    @pl.when(k == num_k - 1)
    def _finalize():
        per_sample = lin_acc[...] + m_acc[...] + jnp.log(s_acc[...])   # [TM, 1]
        # Lane-dense writeback: [TM,1] -> [1,TM] rides the otherwise-idle XLU
        # and turns TM/8 masked single-lane stores into full-width stores.
        o_ref[...] = jnp.transpose(per_sample)


def _vmem_limit_bytes() -> int:
    """Generation-aware scoped-VMEM limit: half of physical VMEM, <= 64 MiB."""
    cap = 128 * _MIB
    try:
        cap = int(getattr(pltpu.get_tpu_info(), "vmem_capacity_bytes", cap))
    except Exception:
        pass  # fall back to the v5e/v6e physical size
    return min(64 * _MIB, cap // 2)          # 64 MiB on v5e/v6e, 32 MiB on v7x


def _choose_tiles(n, c, itemsize, vmem_limit, max_rows, max_classes):
    """Pick (row_tile, class_tile) from the f32 working set, not raw bytes.

    Per chunk element we hold ~2x the native input (double-buffered DMA) plus
    ~3 live f32 [TM,TC] temporaries (exp(x-m), iota/compare, select result).
    """
    bytes_per_elem = 2 * itemsize + 3 * 4
    budget = vmem_limit // 2                  # headroom for output bufs/scratch
    pack = max(8, 32 // itemsize)             # sublane packing: 8/16/32 rows

    force_chunk = max_classes is not None and c > max_classes
    rows_full_c = budget // max(1, c * bytes_per_elem)

    if not force_chunk and rows_full_c >= min(n, pack):
        # Whole class dim fits in one chunk with a reasonable row tile.
        tc = c
        tm = min(rows_full_c, max_rows, n)
        if n >= 256:                          # >= 2 row tiles so the "parallel"
            tm = min(tm, pl.cdiv(n, 2))       # axis can shard across v7x cores
    else:
        # C-chunked (online) path: fix a modest row tile, size the class chunk.
        tm = min(n, max_rows, 256)
        tc = budget // max(1, tm * bytes_per_elem)
        if max_classes is not None:
            tc = min(tc, max_classes)
        tc = min(tc, c)
        tc = max(128, (tc // 128) * 128)
        if tc >= c:
            tc = c

    if tm >= n:
        tm = n
    elif tm >= 128:
        tm = (tm // 128) * 128                # lane-dense output rows
    else:
        tm = max(pack, (tm // pack) * pack)   # dtype-aware sublane alignment
    return tm, tc


def cross_entropy_loss(outputs: jax.Array, targets: jax.Array,
                       epsilon: float = 0.1,
                       max_rows_per_tile: int = 1024,
                       max_classes_per_tile: int | None = None) -> jax.Array:
    """outputs: [N, C] float logits (any float dtype), targets: [N] int -> scalar f32."""
    n, c = outputs.shape
    itemsize = jnp.dtype(outputs.dtype).itemsize
    vmem_limit = _vmem_limit_bytes()
    tm, tc = _choose_tiles(n, c, itemsize, vmem_limit,
                           max_rows_per_tile, max_classes_per_tile)
    row_tiles = pl.cdiv(n, tm)
    class_tiles = pl.cdiv(c, tc)

    t2d = targets.astype(jnp.int32).reshape(n, 1)

    kernel = functools.partial(_ce_kernel, epsilon=float(epsilon),
                               num_classes=c, class_tile=tc)

    per_row = pl.pallas_call(
        kernel,
        out_shape=jax.ShapeDtypeStruct((row_tiles, tm), jnp.float32),
        grid_spec=pltpu.PrefetchScalarGridSpec(
            num_scalar_prefetch=0,
            grid=(row_tiles, class_tiles),
            in_specs=[
                pl.BlockSpec((tm, tc), lambda i, k: (i, k)),   # native-dtype logits
                pl.BlockSpec((tm, 1), lambda i, k: (i, 0)),    # targets (resident over k)
            ],
            out_specs=pl.BlockSpec((1, tm), lambda i, k: (i, 0)),
            scratch_shapes=[
                pltpu.VMEM((tm, 1), jnp.float32),   # running max
                pltpu.VMEM((tm, 1), jnp.float32),   # running sum(exp(x - m))
                pltpu.VMEM((tm, 1), jnp.float32),   # running fused linear term
            ],
        ),
        compiler_params=pltpu.CompilerParams(
            dimension_semantics=("parallel", "arbitrary"),
            vmem_limit_bytes=vmem_limit,
        ),
        cost_estimate=pl.CostEstimate(
            flops=6 * n * c,
            transcendentals=n * c,
            bytes_accessed=n * c * itemsize + n * 4 + row_tiles * tm * 4,
        ),
    )(outputs, t2d)

    # Per-row losses; padded tail-tile rows are garbage by construction and are
    # sliced off here before the tiny [N] mean done in plain JAX.
    # TODO(synk): add ignore_index / class-weight support if full nn.CrossEntropyLoss
    # parity (beyond this module's label-smoothed NLL) is ever needed.
    return jnp.mean(per_row.reshape(-1)[:n])


def _reference(outputs, targets, epsilon=0.1):
    logp = jax.nn.log_softmax(outputs.astype(jnp.float32), axis=-1)
    mean_lp = jnp.mean(logp, axis=-1)
    nll = jnp.take_along_axis(logp, targets[:, None].astype(jnp.int32), axis=-1)[:, 0]
    return jnp.mean((epsilon - 1.0) * nll - epsilon * mean_lp)


if __name__ == "__main__":
    key = jax.random.PRNGKey(0)

    # 1) Small shape consistent with the module: batch of 8 samples, 32 classes.
    k1, k2 = jax.random.split(key)
    N, C = 8, 32
    outputs = jax.random.normal(k1, (N, C), dtype=jnp.float32)
    targets = jax.random.randint(k2, (N,), 0, C, dtype=jnp.int32)
    loss = jax.block_until_ready(cross_entropy_loss(outputs, targets, epsilon=0.1))
    ref = _reference(outputs, targets, epsilon=0.1)
    assert jnp.allclose(loss, ref, atol=1e-5, rtol=1e-5), (loss, ref)

    # 2) Multi-row-tile grid with a partial tail tile and bf16 logits
    #    (exercises row tiling, lane-dense output, native-dtype streaming).
    k3, k4 = jax.random.split(k2)
    N2, C2 = 200, 128
    outputs2 = jax.random.normal(k3, (N2, C2), dtype=jnp.float32).astype(jnp.bfloat16)
    targets2 = jax.random.randint(k4, (N2,), 0, C2, dtype=jnp.int32)
    loss2 = jax.block_until_ready(
        cross_entropy_loss(outputs2, targets2, epsilon=0.1, max_rows_per_tile=64))
    ref2 = _reference(outputs2, targets2, epsilon=0.1)
    assert jnp.allclose(loss2, ref2, atol=1e-4, rtol=1e-4), (loss2, ref2)

    # 3) Force the class-chunked online path with a ragged last chunk
    #    (exercises the flash-softmax accumulators and column masking).
    k5, k6 = jax.random.split(k4)
    N3, C3 = 64, 160
    outputs3 = jax.random.normal(k5, (N3, C3), dtype=jnp.float32)
    targets3 = jax.random.randint(k6, (N3,), 0, C3, dtype=jnp.int32)
    loss3 = jax.block_until_ready(
        cross_entropy_loss(outputs3, targets3, epsilon=0.1, max_classes_per_tile=128))
    ref3 = _reference(outputs3, targets3, epsilon=0.1)
    assert jnp.allclose(loss3, ref3, atol=1e-5, rtol=1e-5), (loss3, ref3)

    print("KERNEL_OK")
</pallas_src>

<mosaic_0001>
module attributes {stable_mosaic.version = 11 : i64} {
  func.func @_ce_kernel(%arg0: i32, %arg1: i32, %arg2: memref<8x32xf32, #tpu.memory_space<vmem>>, %arg3: memref<8x1xi32, #tpu.memory_space<vmem>>, %arg4: memref<1x8xf32, #tpu.memory_space<vmem>>, %arg5: memref<8x1xf32, #tpu.memory_space<vmem>>, %arg6: memref<8x1xf32, #tpu.memory_space<vmem>>, %arg7: memref<8x1xf32, #tpu.memory_space<vmem>>) attributes {dimension_semantics = [#tpu.dimension_semantics<parallel>, #tpu.dimension_semantics<arbitrary>], iteration_bounds = array<i64: 1, 1>, scalar_prefetch = 0 : i64, scratch_operands = 3 : i64, tpu.core_type = #tpu.core_type<tc>, window_params = [{transform_indices = @transform_0, window_bounds = array<i64: 8, 32>}, {transform_indices = @transform_1, window_bounds = array<i64: 8, 1>}, {transform_indices = @transform_2, window_bounds = array<i64: 1, 8>}]} {
    %c0_i32 = arith.constant 0 : i32
    %0 = arith.cmpi eq, %arg1, %c0_i32 : i32
    %1 = arith.extui %0 : i1 to i32
    %c0_i32_0 = arith.constant 0 : i32
    %2 = arith.cmpi ne, %1, %c0_i32_0 : i32
    scf.if %2 {
      %cst_23 = arith.constant 0xFF800000 : f32
      %42 = vector.broadcast %cst_23 : f32 to vector<8x1xf32>
      %c0_24 = arith.constant 0 : index
      %c0_25 = arith.constant 0 : index
      %43 = vector.load %arg5[%c0_24, %c0_25] : memref<8x1xf32, #tpu.memory_space<vmem>>, vector<8x1xf32>
      tpu.vector_store %arg5[%c0_24, %c0_25], %42 {strides = array<i32>} : memref<8x1xf32, #tpu.memory_space<vmem>>, vector<8x1xf32>,
      %cst_26 = arith.constant 0.000000e+00 : f32
      %44 = vector.broadcast %cst_26 : f32 to vector<8x1xf32>
      %c0_27 = arith.constant 0 : index
      %c0_28 = arith.constant 0 : index
      %45 = vector.load %arg6[%c0_27, %c0_28] : memref<8x1xf32, #tpu.memory_space<vmem>>, vector<8x1xf32>
      tpu.vector_store %arg6[%c0_27, %c0_28], %44 {strides = array<i32>} : memref<8x1xf32, #tpu.memory_space<vmem>>, vector<8x1xf32>,
      %cst_29 = arith.constant 0.000000e+00 : f32
      %46 = vector.broadcast %cst_29 : f32 to vector<8x1xf32>
      %c0_30 = arith.constant 0 : index
      %c0_31 = arith.constant 0 : index
      %47 = vector.load %arg7[%c0_30, %c0_31] : memref<8x1xf32, #tpu.memory_space<vmem>>, vector<8x1xf32>
      tpu.vector_store %arg7[%c0_30, %c0_31], %46 {strides = array<i32>} : memref<8x1xf32, #tpu.memory_space<vmem>>, vector<8x1xf32>,
    } else {
    }
    %c0 = arith.constant 0 : index
    %c0_1 = arith.constant 0 : index
    %3 = vector.load %arg2[%c0, %c0_1] : memref<8x32xf32, #tpu.memory_space<vmem>>, vector<8x32xf32>
    %c0_2 = arith.constant 0 : index
    %c0_3 = arith.constant 0 : index
    %4 = vector.load %arg3[%c0_2, %c0_3] : memref<8x1xi32, #tpu.memory_space<vmem>>, vector<8x1xi32>
    %c32_i32 = arith.constant 32 : i32
    %5 = arith.muli %c32_i32, %arg1 : i32
    %6 = tpu.iota {dimensions = array<i32: 1>} : vector<8x32xi32>
    %7 = vector.broadcast %5 : i32 to vector<8x32xi32>
    %8 = arith.addi %7, %6 : vector<8x32xi32>
    %c0_4 = arith.constant 0 : index
    %c0_5 = arith.constant 0 : index
    %9 = vector.load %arg5[%c0_4, %c0_5] : memref<8x1xf32, #tpu.memory_space<vmem>>, vector<8x1xf32>
    %cst = arith.constant dense<0xFF800000> : vector<8xf32>
    %10 = vector.multi_reduction <maximumf>, %3, %cst [1] : vector<8x32xf32> to vector<8xf32>
    %11 = vector.shape_cast %10 : vector<8xf32> to vector<8x1xf32>
    %12 = arith.maximumf %9, %11 : vector<8x1xf32>
    %13 = vector.broadcast %12 : vector<8x1xf32> to vector<8x32xf32>
    %14 = arith.subf %3, %13 : vector<8x32xf32>
    %15 = math.exp %14 : vector<8x32xf32>
    %c0_6 = arith.constant 0 : index
    %c0_7 = arith.constant 0 : index
    %16 = vector.load %arg6[%c0_6, %c0_7] : memref<8x1xf32, #tpu.memory_space<vmem>>, vector<8x1xf32>
    %17 = arith.subf %9, %12 : vector<8x1xf32>
    %18 = math.exp %17 : vector<8x1xf32>
    %19 = arith.mulf %16, %18 : vector<8x1xf32>
    %cst_8 = arith.constant dense<0.000000e+00> : vector<8xf32>
    %20 = vector.multi_reduction <add>, %15, %cst_8 [1] : vector<8x32xf32> to vector<8xf32>
    %21 = vector.shape_cast %20 : vector<8xf32> to vector<8x1xf32>
    %22 = arith.addf %19, %21 : vector<8x1xf32>
    %c0_9 = arith.constant 0 : index
    %c0_10 = arith.constant 0 : index
    %23 = vector.load %arg6[%c0_9, %c0_10] : memref<8x1xf32, #tpu.memory_space<vmem>>, vector<8x1xf32>
    tpu.vector_store %arg6[%c0_9, %c0_10], %22 {strides = array<i32>} : memref<8x1xf32, #tpu.memory_space<vmem>>, vector<8x1xf32>,
    %c0_11 = arith.constant 0 : index
    %c0_12 = arith.constant 0 : index
    %24 = vector.load %arg5[%c0_11, %c0_12] : memref<8x1xf32, #tpu.memory_space<vmem>>, vector<8x1xf32>
    tpu.vector_store %arg5[%c0_11, %c0_12], %12 {strides = array<i32>} : memref<8x1xf32, #tpu.memory_space<vmem>>, vector<8x1xf32>,
    %c0_13 = arith.constant 0 : index
    %c0_14 = arith.constant 0 : index
    %25 = vector.load %arg7[%c0_13, %c0_14] : memref<8x1xf32, #tpu.memory_space<vmem>>, vector<8x1xf32>
    %26 = vector.broadcast %4 : vector<8x1xi32> to vector<8x32xi32>
    %27 = arith.cmpi eq, %8, %26 : vector<8x32xi32>
    %cst_15 = arith.constant -0.899999976 : f32
    %28 = vector.broadcast %cst_15 : f32 to vector<8x32xf32>
    %29 = arith.mulf %28, %3 : vector<8x32xf32>
    %cst_16 = arith.constant 0.000000e+00 : f32
    %30 = vector.broadcast %cst_16 : f32 to vector<8x32xf32>
    %31 = arith.select %27, %29, %30 : vector<8x32xi1>, vector<8x32xf32>
    %cst_17 = arith.constant 3.125000e-03 : f32
    %32 = vector.broadcast %cst_17 : f32 to vector<8x32xf32>
    %33 = arith.mulf %32, %3 : vector<8x32xf32>
    %34 = arith.subf %31, %33 : vector<8x32xf32>
    %cst_18 = arith.constant dense<0.000000e+00> : vector<8xf32>
    %35 = vector.multi_reduction <add>, %34, %cst_18 [1] : vector<8x32xf32> to vector<8xf32>
    %36 = vector.shape_cast %35 : vector<8xf32> to vector<8x1xf32>
    %37 = arith.addf %25, %36 : vector<8x1xf32>
    %c0_19 = arith.constant 0 : index
    %c0_20 = arith.constant 0 : index
    %38 = vector.load %arg7[%c0_19, %c0_20] : memref<8x1xf32, #tpu.memory_space<vmem>>, vector<8x1xf32>
    tpu.vector_store %arg7[%c0_19, %c0_20], %37 {strides = array<i32>} : memref<8x1xf32, #tpu.memory_space<vmem>>, vector<8x1xf32>,
    %c0_i32_21 = arith.constant 0 : i32
    %39 = arith.cmpi eq, %arg1, %c0_i32_21 : i32
    %40 = arith.extui %39 : i1 to i32
    %c0_i32_22 = arith.constant 0 : i32
    %41 = arith.cmpi ne, %40, %c0_i32_22 : i32
    scf.if %41 {
      %c0_23 = arith.constant 0 : index
      %c0_24 = arith.constant 0 : index
      %42 = vector.load %arg7[%c0_23, %c0_24] : memref<8x1xf32, #tpu.memory_space<vmem>>, vector<8x1xf32>
      %c0_25 = arith.constant 0 : index
      %c0_26 = arith.constant 0 : index
      %43 = vector.load %arg5[%c0_25, %c0_26] : memref<8x1xf32, #tpu.memory_space<vmem>>, vector<8x1xf32>
      %44 = arith.addf %42, %43 : vector<8x1xf32>
      %c0_27 = arith.constant 0 : index
      %c0_28 = arith.constant 0 : index
      %45 = vector.load %arg6[%c0_27, %c0_28] : memref<8x1xf32, #tpu.memory_space<vmem>>, vector<8x1xf32>
      %46 = math.log %45 : vector<8x1xf32>
      %47 = arith.addf %44, %46 : vector<8x1xf32>
      %48 = tpu.transpose %47, [1, 0] : vector<8x1xf32> -> vector<1x8xf32>
      %c0_29 = arith.constant 0 : index
      %c0_30 = arith.constant 0 : index
      %49 = vector.load %arg4[%c0_29, %c0_30] : memref<1x8xf32, #tpu.memory_space<vmem>>, vector<1x8xf32>
      tpu.vector_store %arg4[%c0_29, %c0_30], %48 {strides = array<i32>} : memref<1x8xf32, #tpu.memory_space<vmem>>, vector<1x8xf32>,
    } else {
    }
    return
  }
  func.func @transform_0(%arg0: i32, %arg1: i32) -> (i32, i32) {
    %c0_i32 = arith.constant 0 : i32
    return %arg0, %arg1 : i32, i32
  }
  func.func @transform_1(%arg0: i32, %arg1: i32) -> (i32, i32) {
    %c0_i32 = arith.constant 0 : i32
    %c0_i32_0 = arith.constant 0 : i32
    return %arg0, %c0_i32 : i32, i32
  }
  func.func @transform_2(%arg0: i32, %arg1: i32) -> (i32, i32) {
    %c0_i32 = arith.constant 0 : i32
    %c0_i32_0 = arith.constant 0 : i32
    return %arg0, %c0_i32 : i32, i32
  }
}

</mosaic_0001>

<llo_original>
// kernel: tpu_custom_call.1
$region0: #{tpu_custom_call.1}
  #allocation0 [shape = 'u32[]', space=smem, size = 0x4, offset = 0x4, fixed_abs, tag = 'smem constant byte address 0x4 - core index']
  #allocation1 [shape = 'u32[144,128]{1,0:T(1,128)}', space=vmem, size = 0x12000, scoped, tag = 'internal scratch']
  #allocation2 [shape = 'f32[8,1]{1,0:T(8,128)}', space=vmem, size = 0x1000, scoped, tag = 'scratch operand']
  #allocation3 [shape = 'f32[8,1]{1,0:T(8,128)}', space=vmem, size = 0x1000, scoped, tag = 'scratch operand']
  #allocation4 [shape = 'f32[8,1]{1,0:T(8,128)}', space=vmem, size = 0x1000, scoped, tag = 'scratch operand']
  %s0 = inlined_call_operand.vmem [shape: f32[8,32], index: 0, kind: input, shape index: {}]
  %s1 = inlined_call_operand.vmem [shape: s32[8,1], index: 1, kind: input, shape index: {}]
  %s2 = inlined_call_operand.hbm [shape: f32[1,8], index: 2, kind: output, shape index: {}]
  %s3 = sld [smem:[#allocation0]]
  $region26: #{tpu_custom_call.1} parent=0
    _
  %s5 = ssub.s32 1, %s3
  %s6 = scalar_select 0, %s5, %s3
  $region1: #{tpu_custom_call.1} parent=0
    #allocation5 [shape = 'u8[512]{0}', space=vmem, size = 0x400, scoped, tag = 'output window, operand 0, single buffered']
    #allocation6 [shape = 's32[1]{0}', space=sflag, size = 0x4, scoped, tag = 'scoped memory for tpu_custom_call.1']
    %7 = vsyncpa [#allocation6], 0
    // Predicated region
    $region2: #{tpu_custom_call.1} parent=1 // pred_check
      _
    $region3: #{tpu_custom_call.1} parent=1 // pred_check_branch
      %9 = sbr.rel (0) target = $region5
    $region4: #{tpu_custom_call.1} parent=1 // pred_region
      _
    $region5: #{tpu_custom_call.1} parent=1 // pred_fallthru
      _
    // Predicated region
    $region6: #{tpu_custom_call.1} parent=1 // pred_check
      _
    $region7: #{tpu_custom_call.1} parent=1 // pred_check_branch
      %11 = sbr.rel (0) target = $region9
    $region8: #{tpu_custom_call.1} parent=1 // pred_region
      _
    $region9: #{tpu_custom_call.1} parent=1 // pred_fallthru
      _
    %p12 = scmp.eq.s32.totalorder 0, 0
    // Predicated region
    $region10: #{tpu_custom_call.1} parent=1 // pred_check
      %p13 = pneg %p12
    $region11: #{tpu_custom_call.1} parent=1 // pred_check_branch
      %15 = sbr.rel (%p13) target = $region13
    $region12: #{tpu_custom_call.1} parent=1 // pred_region
      %vm16 = vcmask 7168
      %17 = vst.msk [vmem:[#allocation2] sm:$0xff] %vm16, -inf
      %18 = vst.msk [vmem:[#allocation3] sm:$0xff] %vm16, 0.0
      %19 = vst.msk [vmem:[#allocation4] sm:$0xff] %vm16, 0.0
    $region13: #{tpu_custom_call.1} parent=1 // pred_fallthru
      _
    %v20 = vld [vmem:[%s0] sm:$0xff]
    %v21 = vld [vmem:[%s1] sm:$0xff]
    %s22 = smul.u32 0, 32
    %v23 = vlaneseq
    %v24 = vand.u32 %v23, 127
    %v25 = vstv %s22
    %v26 = vadd.s32 %v25, %v24
    %v27 = vld [vmem:[#allocation2] sm:$0xff]
    %vm28 = vcmask 261120
    %v29 = vsel %vm28, %v20, -inf
    %30 = vmax.xlane.f32.xlu0 %v29
    %v31 = vpop.xlane.xlu0 %30
    %v32 = vmax.f32 %v27, %v31
    %34 = vset.pattern.permute.xlu0 0
    %35 = vperm.xlu0 %34, %v32
    %v36 = vpop.permute.xlu0 %35
    %v38 = vsub.f32 %v20, %v36
    %v39 = vmul.f32 %v38, 1.442695
    %v40 = vpow.pop %v39
    %v41 = vld [vmem:[#allocation3] sm:$0xff]
    %v42 = vsub.f32 %v27, %v32
    %v43 = vmul.f32 %v42, 1.442695
    %v44 = vpow.pop %v43
    %v45 = vmul.f32 %v41, %v44
    %v46 = vsel %vm28, %v40, 0.0
    %47 = vadd.xlane.f32.xlu0 %v46
    %v48 = vpop.xlane.xlu0 %47
    %v49 = vadd.f32 %v45, %v48
    %vm50 = vcmask 7168
    %51 = vst.msk [vmem:[#allocation3] sm:$0xff] %vm50, %v49
    %52 = vst.msk [vmem:[#allocation2] sm:$0xff] %vm50, %v32
    %v53 = vld [vmem:[#allocation4] sm:$0xff]
    %54 = vset.pattern.permute.xlu0 0
    %55 = vperm.xlu0 %54, %v21
    %v56 = vpop.permute.xlu0 %55
    %vm57 = vcmp.eq.s32.totalorder %v26, %v56
    %v58 = vmul.f32 %v20, -0.9
    %v59 = vsel %vm57, %v58, 0.0
    %v60 = vmul.f32 %v20, 0.003125
    %v61 = vsub.f32 %v59, %v60
    %v62 = vsel %vm28, %v61, 0.0
    %63 = vadd.xlane.f32.xlu0 %v62
    %v64 = vpop.xlane.xlu0 %63
    %v65 = vadd.f32 %v53, %v64
    %66 = vst.msk [vmem:[#allocation4] sm:$0xff] %vm50, %v65
    // Predicated region
    $region14: #{tpu_custom_call.1} parent=1 // pred_check
      %p67 = pneg %p12
    $region15: #{tpu_custom_call.1} parent=1 // pred_check_branch
      %69 = sbr.rel (%p67) target = $region17
    $region16: #{tpu_custom_call.1} parent=1 // pred_region
      %v70 = vld [vmem:[#allocation4] sm:$0xff]
      %v71 = vld [vmem:[#allocation2] sm:$0xff]
      %v72 = vadd.f32 %v70, %v71
      %v73 = vld [vmem:[#allocation3] sm:$0xff]
      %v74 = vlog2.pop %v73
      %v75 = vmul.f32 %v74, 0.6931472
      %v76 = vadd.f32 %v72, %v75
      %77 = vxpose.xlu0.b32.start [1/16] %v76, 128
      %78 = vxpose.xlu0.b32.cont [2/16] 0.0, 128
      %79 = vxpose.xlu0.b32.cont [3/16] 0.0, 128
      %80 = vxpose.xlu0.b32.cont [4/16] 0.0, 128
      %81 = vxpose.xlu0.b32.cont [5/16] 0.0, 128
      %82 = vxpose.xlu0.b32.cont [6/16] 0.0, 128
      %83 = vxpose.xlu0.b32.cont [7/16] 0.0, 128
      %84 = vxpose.xlu0.b32.cont [8/16] 0.0, 128
      %85 = vxpose.xlu0.b32.cont [9/16] 0.0, 128
      %86 = vxpose.xlu0.b32.cont [10/16] 0.0, 128
      %87 = vxpose.xlu0.b32.cont [11/16] 0.0, 128
      %88 = vxpose.xlu0.b32.cont [12/16] 0.0, 128
      %89 = vxpose.xlu0.b32.cont [13/16] 0.0, 128
      %90 = vxpose.xlu0.b32.cont [14/16] 0.0, 128
      %91 = vxpose.xlu0.b32.cont [15/16] 0.0, 128
      %92 = vxpose.xlu0.b32.end [16/16] 0.0, 128
      %v93 = vpop.trf.xlu0
      %v94 = vpop.trf.xlu0
      %v95 = vpop.trf.xlu0
      %v96 = vpop.trf.xlu0
      %v97 = vpop.trf.xlu0
      %v98 = vpop.trf.xlu0
      %v99 = vpop.trf.xlu0
      %v100 = vpop.trf.xlu0
      %v101 = vpop.trf.xlu0
      %v102 = vpop.trf.xlu0
      %v103 = vpop.trf.xlu0
      %v104 = vpop.trf.xlu0
      %v105 = vpop.trf.xlu0
      %v106 = vpop.trf.xlu0
      %v107 = vpop.trf.xlu0
      %v108 = vpop.trf.xlu0
      %vm109 = vcmask 57344
      %110 = vst.msk [vmem:[#allocation5] sm:$0x1] %vm109, %v93
    $region17: #{tpu_custom_call.1} parent=1 // pred_fallthru
      _
    // Predicated region
    $region18: #{tpu_custom_call.1} parent=1 // pred_check
      _
    $region19: #{tpu_custom_call.1} parent=1 // pred_check_branch
      %112 = sbr.rel (0) target = $region21
    $region20: #{tpu_custom_call.1} parent=1 // pred_region
      %s114 = ssub.s32 16, 16
      %115 = vsyncadd [#allocation6], %s114
      %s117 = sshll.u32 [#allocation5], 4
      %s118 = int_to_ptr.vmem [resolvable:$true] %s117
      %120 = dma.vmem_to_hbm [thread:$0]  %s118, 16, %s2, [#allocation6]
    $region21: #{tpu_custom_call.1} parent=1 // pred_fallthru
      _
    // Predicated region
    $region22: #{tpu_custom_call.1} parent=1 // pred_check
      _
    $region23: #{tpu_custom_call.1} parent=1 // pred_check_branch
      %122 = sbr.rel (0) target = $region25
    $region24: #{tpu_custom_call.1} parent=1 // pred_region
      %123 = dma.done [#allocation6], 16
    $region25: #{tpu_custom_call.1} parent=1 // pred_fallthru
      _
    %124 = vsyncpa [#allocation6], 1

</llo_original>
